<compile_context>
chip_gen: v6e
topology: v6e:2x2x1
jax: 0.10.0
libtpu: 0.0.40
codegen_flags: <defaults>
</compile_context>

<pallas_src>
import functools

import jax
import jax.numpy as jnp
from jax import lax
from jax.experimental import pallas as pl
from jax.experimental.pallas import tpu as pltpu


# --------------------------------------------------------------------------- #
# Stage 1: project K|V once for the whole sequence (lane-dense fused weights). #
# --------------------------------------------------------------------------- #
def _kv_proj_kernel(x_ref, wkv_ref, kv_ref):
    kv_ref[...] = jnp.dot(
        x_ref[...], wkv_ref[...], preferred_element_type=jnp.float32
    ).astype(kv_ref.dtype)


# --------------------------------------------------------------------------- #
# Stage 2: flash-style causal attention + output projection.                   #
# --------------------------------------------------------------------------- #
def _mha_flash_kernel(xq_ref, kv_ref, wq_ref, wo_ref, o_ref,
                      q_scr, m_scr, l_scr, acc_scr, *,
                      n_heads, d_head, scale, block_q, block_kv, compute_dtype):
    ht = n_heads * d_head
    tq = xq_ref.shape[0]
    tk = kv_ref.shape[0]

    i = pl.program_id(0)          # query-tile index   ("parallel")
    j = pl.program_id(1)          # kv-tile index      ("arbitrary")
    q_start = i * block_q
    kv_start = j * block_kv

    @pl.when(j == 0)
    def _init():
        # Project Q for this query tile once (reused across all KV tiles).
        q = jnp.dot(xq_ref[...], wq_ref[...],
                    preferred_element_type=jnp.float32) * scale        # (tq, Ht)
        q = q.reshape(tq, n_heads, d_head).transpose(1, 0, 2)          # (H, tq, dh)
        q_scr[...] = q.astype(q_scr.dtype)
        m_scr[...] = jnp.full(m_scr.shape, -1e30, dtype=m_scr.dtype)
        l_scr[...] = jnp.zeros_like(l_scr)
        acc_scr[...] = jnp.zeros_like(acc_scr)

    # Skip KV tiles that are entirely above the causal diagonal for this q tile.
    @pl.when(kv_start < q_start + block_q)
    def _compute():
        kvt = kv_ref[...].reshape(tk, 2 * n_heads, d_head).transpose(1, 0, 2)
        k = kvt[:n_heads]                                               # (H, tk, dh)
        v = kvt[n_heads:]                                               # (H, tk, dh)
        q = q_scr[...]                                                  # (H, tq, dh)

        # Batched QK^T over all heads (bf16 MXU inputs when compute_dtype=bf16).
        s = jnp.einsum('hqd,hkd->hqk', q, k,
                       preferred_element_type=jnp.float32)              # (H, tq, tk)

        # Additive causal bias, built once per step and shared by all heads.
        row = lax.broadcasted_iota(jnp.int32, (tq, tk), 0) + q_start
        col = lax.broadcasted_iota(jnp.int32, (tq, tk), 1) + kv_start
        bias = jnp.where(col > row, -1e30, 0.0).astype(jnp.float32)
        s = s + bias[None, :, :]

        # Online softmax update (always f32).
        m_prev = m_scr[...]
        m_new = jnp.maximum(m_prev, jnp.max(s, axis=-1, keepdims=True))
        alpha = jnp.exp(m_prev - m_new)
        p = jnp.exp(s - m_new)
        l_scr[...] = alpha * l_scr[...] + jnp.sum(p, axis=-1, keepdims=True)
        acc_scr[...] = alpha * acc_scr[...] + jnp.einsum(
            'hqk,hkd->hqd', p.astype(compute_dtype), v,
            preferred_element_type=jnp.float32)                         # (H, tq, dh)
        m_scr[...] = m_new

    @pl.when(j == pl.num_programs(1) - 1)
    def _finalize():
        ctx = acc_scr[...] / l_scr[...]                                 # (H, tq, dh)
        ctx = ctx.transpose(1, 0, 2).reshape(tq, ht)                    # (tq, Ht)
        # concat_h(ctx_h) @ Wo_fused == sum_h ctx_h @ W_o[h].
        o_ref[...] = jnp.dot(ctx.astype(compute_dtype), wo_ref[...],
                             preferred_element_type=jnp.float32
                             ).astype(o_ref.dtype)


def multi_headed_attention(x, w_q, w_k, w_v, w_o, *, block_q=128, block_kv=128,
                           compute_dtype=jnp.float32):
    """x: (S, D); w_q/w_k/w_v: (H, D, dh); w_o: (H, dh, D). Returns (S, D) f32."""
    n_heads, d_model, d_head = w_q.shape
    seq = x.shape[0]
    ht = n_heads * d_head

    # Pack per-head weights into fused, lane-dense matrices:
    #   Wq_f[:, h*dh:(h+1)*dh] == w_q[h]  (same for K, V);  Wo_f[h*dh:(h+1)*dh] == w_o[h]
    wq_f = jnp.transpose(w_q, (1, 0, 2)).reshape(d_model, ht).astype(compute_dtype)
    wk_f = jnp.transpose(w_k, (1, 0, 2)).reshape(d_model, ht)
    wv_f = jnp.transpose(w_v, (1, 0, 2)).reshape(d_model, ht)
    wkv_f = jnp.concatenate([wk_f, wv_f], axis=1).astype(compute_dtype)   # (D, 2*Ht)
    wo_f = w_o.reshape(ht, d_model).astype(compute_dtype)                 # (Ht, D)
    x_c = x.astype(compute_dtype)

    # ---- stage 1: K|V projection, once per sequence ------------------------
    ts = min(block_q, seq)
    assert seq % ts == 0, "seq must be divisible by the projection tile size"
    kv = pl.pallas_call(
        _kv_proj_kernel,
        out_shape=jax.ShapeDtypeStruct((seq, 2 * ht), compute_dtype),
        grid_spec=pltpu.PrefetchScalarGridSpec(
            num_scalar_prefetch=0,
            grid=(seq // ts,),
            in_specs=[pl.BlockSpec((ts, d_model), lambda i: (i, 0)),
                      pl.BlockSpec((d_model, 2 * ht), lambda i: (0, 0))],
            out_specs=pl.BlockSpec((ts, 2 * ht), lambda i: (i, 0)),
        ),
        compiler_params=pltpu.CompilerParams(dimension_semantics=("parallel",)),
        cost_estimate=pl.CostEstimate(
            flops=2 * seq * d_model * 2 * ht,
            transcendentals=0,
            bytes_accessed=4 * (seq * d_model + d_model * 2 * ht + seq * 2 * ht)),
    )(x_c, wkv_f)

    # ---- stage 2: flash attention + output projection ----------------------
    tq = min(block_q, seq)
    tk = min(block_kv, seq)
    assert seq % tq == 0 and seq % tk == 0, "seq must be divisible by tile sizes"
    n_q, n_kv = seq // tq, seq // tk

    kernel = functools.partial(
        _mha_flash_kernel, n_heads=n_heads, d_head=d_head,
        scale=1.0 / (d_head ** 0.5), block_q=tq, block_kv=tk,
        compute_dtype=compute_dtype)

    cost = pl.CostEstimate(
        flops=(2 * seq * d_model * ht            # Q projection
               + 2 * 2 * seq * seq * ht          # QK^T + PV (upper bound, pre-skip)
               + 2 * seq * ht * d_model),        # output projection
        transcendentals=seq * seq * n_heads,     # exp
        bytes_accessed=4 * (2 * seq * d_model + seq * 2 * ht
                            + d_model * ht + ht * d_model))

    return pl.pallas_call(
        kernel,
        out_shape=jax.ShapeDtypeStruct((seq, d_model), jnp.float32),
        grid_spec=pltpu.PrefetchScalarGridSpec(
            num_scalar_prefetch=0,
            grid=(n_q, n_kv),
            in_specs=[
                pl.BlockSpec((tq, d_model), lambda i, j: (i, 0)),      # x (query rows)
                pl.BlockSpec((tk, 2 * ht), lambda i, j: (j, 0)),       # projected K|V tile
                pl.BlockSpec((d_model, ht), lambda i, j: (0, 0)),      # Wq fused
                pl.BlockSpec((ht, d_model), lambda i, j: (0, 0)),      # Wo fused
            ],
            out_specs=pl.BlockSpec((tq, d_model), lambda i, j: (i, 0)),
            scratch_shapes=[
                pltpu.VMEM((n_heads, tq, d_head), compute_dtype),      # q tile (per head)
                pltpu.VMEM((n_heads, tq, 1), jnp.float32),             # m (running max)
                pltpu.VMEM((n_heads, tq, 1), jnp.float32),             # l (running sum)
                pltpu.VMEM((n_heads, tq, d_head), jnp.float32),        # acc (context)
            ]),
        compiler_params=pltpu.CompilerParams(
            dimension_semantics=("parallel", "arbitrary")),
        cost_estimate=cost,
    )(x_c, kv, wq_f, wo_f)


def _reference(x, w_q, w_k, w_v, w_o):
    """Pure-JAX replica of the PyTorch forward for verification."""
    n_heads, d_model, d_head = w_q.shape
    s = x.shape[0]
    mask = jnp.where(
        jnp.triu(jnp.ones((s, s), dtype=bool), k=1), -jnp.inf, 0.0
    ).astype(jnp.float32)
    out = jnp.zeros((s, d_model), jnp.float32)
    for h in range(n_heads):
        q = x @ w_q[h]
        k = x @ w_k[h]
        v = x @ w_v[h]
        scores = q @ k.T / (d_head ** 0.5) + mask
        attn = jax.nn.softmax(scores, axis=-1)
        out = out + attn @ v @ w_o[h]
    return out


if __name__ == "__main__":
    # GPTConfig defaults: d_model=128, d_head=32, n_heads=4.
    d_model, d_head, n_heads = 128, 32, 4

    key = jax.random.PRNGKey(0)
    kq, kk, kv_, ko, kx = jax.random.split(key, 5)
    w_q = jax.random.normal(kq, (n_heads, d_model, d_head), jnp.float32) * (d_model ** -0.5)
    w_k = jax.random.normal(kk, (n_heads, d_model, d_head), jnp.float32) * (d_model ** -0.5)
    w_v = jax.random.normal(kv_, (n_heads, d_model, d_head), jnp.float32) * (d_model ** -0.5)
    w_o = jax.random.normal(ko, (n_heads, d_head, d_model), jnp.float32) * (d_head ** -0.5)

    # 1) Small single-tile case (seq=8): whole sequence in one (q, kv) tile.
    x8 = jax.random.normal(jax.random.fold_in(kx, 0), (8, d_model), jnp.float32)
    out8 = jax.block_until_ready(multi_headed_attention(x8, w_q, w_k, w_v, w_o))
    ref8 = _reference(x8, w_q, w_k, w_v, w_o)
    assert out8.shape == (8, d_model)
    assert jnp.allclose(out8, ref8, atol=2e-3, rtol=2e-3), "f32 (seq=8) mismatch"

    # 2) Multi-tile case (seq=256): exercises flash KV streaming + causal skip.
    x256 = jax.random.normal(jax.random.fold_in(kx, 1), (256, d_model), jnp.float32)
    out256 = jax.block_until_ready(multi_headed_attention(x256, w_q, w_k, w_v, w_o))
    ref256 = _reference(x256, w_q, w_k, w_v, w_o)
    assert out256.shape == (256, d_model)
    assert jnp.allclose(out256, ref256, atol=2e-3, rtol=2e-3), "f32 (seq=256) mismatch"

    # 3) bf16 MXU-input path (q/k/v/p in bf16, f32 softmax & accumulation).
    out_bf16 = jax.block_until_ready(
        multi_headed_attention(x256, w_q, w_k, w_v, w_o, compute_dtype=jnp.bfloat16))
    assert jnp.allclose(out_bf16, ref256, atol=2e-1, rtol=2e-1), "bf16 mismatch"

    print("KERNEL_OK")
</pallas_src>

<mosaic_0001>
module attributes {stable_mosaic.version = 11 : i64} {
  func.func @_kv_proj_kernel(%arg0: i32, %arg1: memref<8x128xf32, #tpu.memory_space<vmem>>, %arg2: memref<128x256xf32, #tpu.memory_space<vmem>>, %arg3: memref<8x256xf32, #tpu.memory_space<vmem>>) attributes {dimension_semantics = [#tpu.dimension_semantics<parallel>], iteration_bounds = array<i64: 1>, scalar_prefetch = 0 : i64, scratch_operands = 0 : i64, tpu.core_type = #tpu.core_type<tc>, window_params = [{transform_indices = @transform_0, window_bounds = array<i64: 8, 128>}, {pipeline_mode = #tpu.pipeline_mode<synchronous>, transform_indices = @transform_1, window_bounds = array<i64: 128, 256>}, {transform_indices = @transform_2, window_bounds = array<i64: 8, 256>}]} {
    %c0 = arith.constant 0 : index
    %c0_0 = arith.constant 0 : index
    %0 = vector.load %arg1[%c0, %c0_0] : memref<8x128xf32, #tpu.memory_space<vmem>>, vector<8x128xf32>
    %c0_1 = arith.constant 0 : index
    %c0_2 = arith.constant 0 : index
    %1 = vector.load %arg2[%c0_1, %c0_2] : memref<128x256xf32, #tpu.memory_space<vmem>>, vector<128x256xf32>
    %cst = arith.constant dense<0.000000e+00> : vector<8x256xf32>
    %2 = tpu.matmul %0, %1, %cst {dimension_numbers = #tpu.dot_dimension_numbers<[1], [0], [0], [1], [0, 0, 1, 1], [], []>} : vector<8x128xf32>, vector<128x256xf32>, vector<8x256xf32> -> vector<8x256xf32>
    %c0_3 = arith.constant 0 : index
    %c0_4 = arith.constant 0 : index
    %3 = vector.load %arg3[%c0_3, %c0_4] : memref<8x256xf32, #tpu.memory_space<vmem>>, vector<8x256xf32>
    tpu.vector_store %arg3[%c0_3, %c0_4], %2 {strides = array<i32>} : memref<8x256xf32, #tpu.memory_space<vmem>>, vector<8x256xf32>,
    return
  }
  func.func @transform_0(%arg0: i32) -> (i32, i32) {
    %c0_i32 = arith.constant 0 : i32
    %c0_i32_0 = arith.constant 0 : i32
    return %arg0, %c0_i32 : i32, i32
  }
  func.func @transform_1(%arg0: i32) -> (i32, i32) {
    %c0_i32 = arith.constant 0 : i32
    %c0_i32_0 = arith.constant 0 : i32
    %c0_i32_1 = arith.constant 0 : i32
    return %c0_i32, %c0_i32_0 : i32, i32
  }
  func.func @transform_2(%arg0: i32) -> (i32, i32) {
    %c0_i32 = arith.constant 0 : i32
    %c0_i32_0 = arith.constant 0 : i32
    return %arg0, %c0_i32 : i32, i32
  }
}

</mosaic_0001>

<llo_original>
// kernel: tpu_custom_call.1
$region0: #{tpu_custom_call.1}
  #allocation0 [shape = 'u32[]', space=smem, size = 0x4, offset = 0x4, fixed_abs, tag = 'smem constant byte address 0x4 - core index']
  #allocation1 [shape = 'u32[144,128]{1,0:T(1,128)}', space=vmem, size = 0x12000, scoped, tag = 'internal scratch']
  %s0 = inlined_call_operand.hbm [shape: f32[8,128], index: 0, kind: input, shape index: {}]
  %s1 = inlined_call_operand.hbm [shape: f32[128,256], index: 1, kind: input, shape index: {}]
  %s2 = inlined_call_operand.hbm [shape: f32[8,256], index: 2, kind: output, shape index: {}]
  %s3 = sld [smem:[#allocation0]]
  $region26: #{tpu_custom_call.1} parent=0
    _
  %s5 = ssub.s32 1, %s3
  %s6 = scalar_select 0, %s5, %s3
  $region1: #{tpu_custom_call.1} parent=0
    #allocation2 [shape = 'u8[4096]{0}', space=vmem, size = 0x1000, scoped, tag = 'input window, operand 0, single buffered']
    #allocation3 [shape = 's32[1]{0}', space=sflag, size = 0x4, scoped, tag = 'scoped memory for tpu_custom_call.1']
    #allocation4 [shape = 's32[1]{0}', space=sflag, size = 0x4, scoped, tag = 'scoped memory for tpu_custom_call.1']
    #allocation5 [shape = 'u8[131072]{0}', space=vmem, size = 0x20000, scoped, tag = 'input window, operand 1, single buffered']
    #allocation6 [shape = 's32[1]{0}', space=sflag, size = 0x4, scoped, tag = 'scoped memory for tpu_custom_call.1']
    #allocation7 [shape = 'u8[8192]{0}', space=vmem, size = 0x2000, scoped, tag = 'output window, operand 0, single buffered']
    %7 = vsyncpa [#allocation3], 0
    %8 = vsyncpa [#allocation6], 0
    %9 = vsyncpa [#allocation4], 0
    // Predicated region
    $region2: #{tpu_custom_call.1} parent=1 // pred_check
      _
    $region3: #{tpu_custom_call.1} parent=1 // pred_check_branch
      %11 = sbr.rel (0) target = $region5
    $region4: #{tpu_custom_call.1} parent=1 // pred_region
      %s13 = ssub.s32 128, 128
      %14 = vsyncadd [#allocation3], %s13
      %s16 = sshll.u32 [#allocation2], 4
      %s17 = int_to_ptr.vmem [resolvable:$true] %s16
      %19 = dma.hbm_to_vmem [thread:$0]  %s0, 128, %s17, [#allocation3]
    $region5: #{tpu_custom_call.1} parent=1 // pred_fallthru
      _
    // Predicated region
    $region6: #{tpu_custom_call.1} parent=1 // pred_check
      _
    $region7: #{tpu_custom_call.1} parent=1 // pred_check_branch
      %21 = sbr.rel (0) target = $region9
    $region8: #{tpu_custom_call.1} parent=1 // pred_region
      %s23 = ssub.s32 4096, 4096
      %24 = vsyncadd [#allocation6], %s23
      %s25 = sshll.u32 [#allocation5], 4
      %s26 = int_to_ptr.vmem [resolvable:$true] %s25
      %31 = dma.hbm_to_vmem [thread:$0]  %s1, 4096, %s26, [#allocation6], 256, 256, 16
    $region9: #{tpu_custom_call.1} parent=1 // pred_fallthru
      _
    // Predicated region
    $region10: #{tpu_custom_call.1} parent=1 // pred_check
      _
    $region11: #{tpu_custom_call.1} parent=1 // pred_check_branch
      %33 = sbr.rel (0) target = $region13
    $region12: #{tpu_custom_call.1} parent=1 // pred_region
      %34 = dma.done [#allocation3], 128
    $region13: #{tpu_custom_call.1} parent=1 // pred_fallthru
      _
    // Predicated region
    $region14: #{tpu_custom_call.1} parent=1 // pred_check
      _
    $region15: #{tpu_custom_call.1} parent=1 // pred_check_branch
      %36 = sbr.rel (0) target = $region17
    $region16: #{tpu_custom_call.1} parent=1 // pred_region
      %37 = dma.done [#allocation6], 4096
    $region17: #{tpu_custom_call.1} parent=1 // pred_fallthru
      _
    %v38 = vld [vmem:[#allocation2] sm:$0xff]
    %v39 = vld [vmem:[#allocation5] sm:$0xff]
    %v40 = vld [vmem:[#allocation5 + $0x8] sm:$0xff]
    %v41 = vld [vmem:[#allocation5 + $0x10] sm:$0xff]
    %v42 = vld [vmem:[#allocation5 + $0x18] sm:$0xff]
    %v43 = vld [vmem:[#allocation5 + $0x20] sm:$0xff]
    %v44 = vld [vmem:[#allocation5 + $0x28] sm:$0xff]
    %v45 = vld [vmem:[#allocation5 + $0x30] sm:$0xff]
    %v46 = vld [vmem:[#allocation5 + $0x38] sm:$0xff]
    %v47 = vld [vmem:[#allocation5 + $0x40] sm:$0xff]
    %v48 = vld [vmem:[#allocation5 + $0x48] sm:$0xff]
    %v49 = vld [vmem:[#allocation5 + $0x50] sm:$0xff]
    %v50 = vld [vmem:[#allocation5 + $0x58] sm:$0xff]
    %v51 = vld [vmem:[#allocation5 + $0x60] sm:$0xff]
    %v52 = vld [vmem:[#allocation5 + $0x68] sm:$0xff]
    %v53 = vld [vmem:[#allocation5 + $0x70] sm:$0xff]
    %v54 = vld [vmem:[#allocation5 + $0x78] sm:$0xff]
    %v55 = vld [vmem:[#allocation5 + $0x80] sm:$0xff]
    %v56 = vld [vmem:[#allocation5 + $0x88] sm:$0xff]
    %v57 = vld [vmem:[#allocation5 + $0x90] sm:$0xff]
    %v58 = vld [vmem:[#allocation5 + $0x98] sm:$0xff]
    %v59 = vld [vmem:[#allocation5 + $0xa0] sm:$0xff]
    %v60 = vld [vmem:[#allocation5 + $0xa8] sm:$0xff]
    %v61 = vld [vmem:[#allocation5 + $0xb0] sm:$0xff]
    %v62 = vld [vmem:[#allocation5 + $0xb8] sm:$0xff]
    %v63 = vld [vmem:[#allocation5 + $0xc0] sm:$0xff]
    %v64 = vld [vmem:[#allocation5 + $0xc8] sm:$0xff]
    %v65 = vld [vmem:[#allocation5 + $0xd0] sm:$0xff]
    %v66 = vld [vmem:[#allocation5 + $0xd8] sm:$0xff]
    %v67 = vld [vmem:[#allocation5 + $0xe0] sm:$0xff]
    %v68 = vld [vmem:[#allocation5 + $0xe8] sm:$0xff]
    %v69 = vld [vmem:[#allocation5 + $0xf0] sm:$0xff]
    %v70 = vld [vmem:[#allocation5 + $0xf8] sm:$0xff]
    %71 = vmatprep.subr.mxu0 %v70
    %72 = vmatpush1.msra.mxu0 %v69
    %73 = vmatprep.subr.mxu0 %v68
    %74 = vmatpush1.msra.mxu0 %v67
    %75 = vmatprep.subr.mxu0 %v66
    %76 = vmatpush1.msra.mxu0 %v65
    %77 = vmatprep.subr.mxu0 %v64
    %78 = vmatpush1.msra.mxu0 %v63
    %79 = vmatprep.subr.mxu0 %v62
    %80 = vmatpush1.msra.mxu0 %v61
    %81 = vmatprep.subr.mxu0 %v60
    %82 = vmatpush1.msra.mxu0 %v59
    %83 = vmatprep.subr.mxu0 %v58
    %84 = vmatpush1.msra.mxu0 %v57
    %85 = vmatprep.subr.mxu0 %v56
    %86 = vmatpush1.msra.mxu0 %v55
    %87 = vmatprep.subr.mxu0 %v54
    %88 = vmatpush1.msra.mxu0 %v53
    %89 = vmatprep.subr.mxu0 %v52
    %90 = vmatpush1.msra.mxu0 %v51
    %91 = vmatprep.subr.mxu0 %v50
    %92 = vmatpush1.msra.mxu0 %v49
    %93 = vmatprep.subr.mxu0 %v48
    %94 = vmatpush1.msra.mxu0 %v47
    %95 = vmatprep.subr.mxu0 %v46
    %96 = vmatpush1.msra.mxu0 %v45
    %97 = vmatprep.subr.mxu0 %v44
    %98 = vmatpush1.msra.mxu0 %v43
    %99 = vmatprep.subr.mxu0 %v42
    %100 = vmatpush1.msra.mxu0 %v41
    %101 = vmatprep.subr.mxu0 %v40
    %102 = vmatpush1.msra.mxu0 %v39
    %103 = vmatprep.subr.mxu0 0.0
    %104 = vmatpush2.msra.mxu0 0.0
    %105 = vmatprep.subr.mxu0 0.0
    %106 = vmatpush2.msra.mxu0 0.0
    %107 = vmatprep.subr.mxu0 0.0
    %108 = vmatpush2.msra.mxu0 0.0
    %109 = vmatprep.subr.mxu0 0.0
    %110 = vmatpush2.msra.mxu0 0.0
    %111 = vmatprep.subr.mxu0 0.0
    %112 = vmatpush2.msra.mxu0 0.0
    %113 = vmatprep.subr.mxu0 0.0
    %114 = vmatpush2.msra.mxu0 0.0
    %115 = vmatprep.subr.mxu0 0.0
    %116 = vmatpush2.msra.mxu0 0.0
    %117 = vmatprep.subr.mxu0 0.0
    %118 = vmatpush2.msra.mxu0 0.0
    %119 = vmatprep.subr.mxu0 0.0
    %120 = vmatpush2.msra.mxu0 0.0
    %121 = vmatprep.subr.mxu0 0.0
    %122 = vmatpush2.msra.mxu0 0.0
    %123 = vmatprep.subr.mxu0 0.0
    %124 = vmatpush2.msra.mxu0 0.0
    %125 = vmatprep.subr.mxu0 0.0
    %126 = vmatpush2.msra.mxu0 0.0
    %127 = vmatprep.subr.mxu0 0.0
    %128 = vmatpush2.msra.mxu0 0.0
    %129 = vmatprep.subr.mxu0 0.0
    %130 = vmatpush2.msra.mxu0 0.0
    %131 = vmatprep.subr.mxu0 0.0
    %132 = vmatpush2.msra.mxu0 0.0
    %133 = vmatprep.subr.mxu0 0.0
    %134 = vmatpush2.msra.mxu0 0.0
    %135 = vmatprep.mubr.f32.mxu0 0.0
    %136 = vmatmul.mubr.f32.gmra.mxu0 %v38
    %v137 = vpop.f32.mrf.mxu0
    %v138 = vadd.f32 0.0, %v137
    %v139 = vpop.f32.mrf.mxu0
    %v140 = vadd.f32 0.0, %v139
    %141 = vdwg.mxu0
    %142 = vst [vmem:[#allocation7] sm:$0xff] %v138
    %143 = vst [vmem:[#allocation7 + $0x8] sm:$0xff] %v140
    // Predicated region
    $region18: #{tpu_custom_call.1} parent=1 // pred_check
      _
    $region19: #{tpu_custom_call.1} parent=1 // pred_check_branch
      %145 = sbr.rel (0) target = $region21
    $region20: #{tpu_custom_call.1} parent=1 // pred_region
      %s147 = ssub.s32 256, 256
      %148 = vsyncadd [#allocation4], %s147
      %s150 = sshll.u32 [#allocation7], 4
      %s151 = int_to_ptr.vmem [resolvable:$true] %s150
      %153 = dma.vmem_to_hbm [thread:$0]  %s151, 256, %s2, [#allocation4]
    $region21: #{tpu_custom_call.1} parent=1 // pred_fallthru
      _
    // Predicated region
    $region22: #{tpu_custom_call.1} parent=1 // pred_check
      _
    $region23: #{tpu_custom_call.1} parent=1 // pred_check_branch
      %155 = sbr.rel (0) target = $region25
    $region24: #{tpu_custom_call.1} parent=1 // pred_region
      %156 = dma.done [#allocation4], 256
    $region25: #{tpu_custom_call.1} parent=1 // pred_fallthru
      _
    %157 = vsyncpa [#allocation3], 1
    %158 = vsyncpa [#allocation6], 1
    %159 = vsyncpa [#allocation4], 1

</llo_original>
